<compile_context>
chip_gen: v7x
topology: tpu7x:2x2x1
jax: 0.10.0
libtpu: 0.0.40
codegen_flags: <defaults>
</compile_context>

<pallas_src>
import functools

import jax
import jax.numpy as jnp
from jax.experimental import pallas as pl
from jax.experimental.pallas import tpu as pltpu


def _round_up(x, m):
    return (x + m - 1) // m * m


def _bias_layout(H, O, L):
    """Static lane offsets of the bias segments inside the packed bias vector;
    each segment is padded to a 128-lane boundary so in-kernel slices are
    lane-tile aligned."""
    off_m1 = 0                                   # [b_attn | b_comb]   width L+H
    off_x = off_m1 + _round_up(L + H, 128)       # [b_r | b_z | b_in]  width 3H
    off_hn = off_x + _round_up(3 * H, 128)       # b_hn                width H
    off_out = off_hn + _round_up(H, 128)         # b_out               width O
    total = off_out + _round_up(O, 128)
    return off_m1, off_x, off_hn, off_out, total


# --------------------------------------------------------------------------
# Kernel: one grid step == one AttnDecoderRNN.forward timestep.
# --------------------------------------------------------------------------
def _attn_decoder_seq_kernel(emb_ref, hid0_ref, enc_ref,
                             w_cat_ref, w_x_ref, w_ca_ref, w_out_ref, bias_ref,
                             slab_ref, hid_out_ref,
                             h_scr,
                             *, H, O, L, off_m1, off_x, off_hn, off_out, out_w):
    f32 = jnp.float32
    t = pl.program_id(0)

    # Hidden state lives in VMEM scratch across timesteps (no HBM round-trip).
    @pl.when(t == 0)
    def _():
        h_scr[...] = hid0_ref[...]

    emb = emb_ref[0]                    # (B, H) this step's embedded tokens
    hid = h_scr[...]                    # (B, H) h_{t-1}
    enc = enc_ref[...]                  # (B, L, H), VMEM-resident (constant map)

    b_m1 = bias_ref[:, off_m1:off_m1 + L + H]     # [b_attn | b_comb]
    b_x = bias_ref[:, off_x:off_x + 3 * H]        # [b_ir+b_hr | b_iz+b_hz | b_in]
    b_hn = bias_ref[:, off_hn:off_hn + H]         # b_hn
    b_out = bias_ref[:, off_out:off_out + O]      # b_out

    # One block-diagonal MXU pass replaces the separate emb/hid matmuls:
    #   [emb | hid] @ [[w_attn_e|w_comb_e,            0           ],
    #                  [        0        , w_attn_h|w_hr|w_hz|w_hn]]
    cat_eh = jnp.concatenate([emb, hid], axis=1)                      # (B, 2H)
    m_all = jnp.dot(cat_eh, w_cat_ref[...], preferred_element_type=f32)
    m_emb = m_all[:, :L + H] + b_m1                                   # (B, L+H)
    m_hid = m_all[:, L + H:]                                          # (B, L+3H)

    # ---- attn_weights = softmax(attn(cat(emb, hid)), dim=1) ----
    attn_logits = m_emb[:, :L] + m_hid[:, :L]                         # (B, L)
    amax = jnp.max(attn_logits, axis=-1, keepdims=True)
    e = jnp.exp(attn_logits - amax)
    attn_w = e / jnp.sum(e, axis=-1, keepdims=True)   # exact divide (parity)

    # ---- attn_applied = bmm(attn_w, enc): VPU multiply + sublane reduce ----
    # (attn_w has L on lanes, enc has L on sublanes -> one relayout; negligible
    #  at L=8 — accepted knowingly per review.)
    applied = jnp.sum(attn_w[:, :, None] * enc, axis=1)               # (B, H)

    # ---- output = relu(attn_combine(cat(emb, applied))) ----
    comb = m_emb[:, L:L + H] + jnp.dot(applied, w_ca_ref[...],
                                       preferred_element_type=f32)
    x = jnp.maximum(comb, 0.0)

    # ---- one GRU step (PyTorch gate order r, z, n) ----
    gx = jnp.dot(x, w_x_ref[...], preferred_element_type=f32) + b_x   # (B, 3H)
    h_r = m_hid[:, L:L + H]
    h_z = m_hid[:, L + H:L + 2 * H]
    h_n = m_hid[:, L + 2 * H:L + 3 * H]
    r = jax.nn.sigmoid(gx[:, 0:H] + h_r)
    z = jax.nn.sigmoid(gx[:, H:2 * H] + h_z)
    n = jnp.tanh(gx[:, 2 * H:3 * H] + r * (h_n + b_hn))
    h_new = (1.0 - z) * n + z * hid                                   # (B, H)
    h_scr[...] = h_new                                                # carry

    # ---- output = log_softmax(out(h_new), dim=1) ----
    logits = jnp.dot(h_new, w_out_ref[...], preferred_element_type=f32) + b_out
    lmax = jnp.max(logits, axis=-1, keepdims=True)
    s = logits - lmax
    logp = s - jnp.log(jnp.sum(jnp.exp(s), axis=-1, keepdims=True))   # (B, O)

    # ---- single lane-dense store: [logp | attn_w | zero pad] -> (B, out_w) ----
    pad = out_w - (O + L)
    parts = [logp, attn_w]
    if pad:
        parts.append(jnp.zeros((logp.shape[0], pad), f32))
    slab_ref[0] = jnp.concatenate(parts, axis=-1)

    # Final hidden is written back to HBM exactly once, on the last timestep.
    @pl.when(t == pl.num_programs(0) - 1)
    def _():
        hid_out_ref[...] = h_new


# --------------------------------------------------------------------------
# Parameters
# --------------------------------------------------------------------------
def init_raw_params(key, hidden_size, output_size, max_length):
    """Random parameters in the layouts the PyTorch module holds them."""
    H, O, L = hidden_size, output_size, max_length
    ks = jax.random.split(key, 10)
    s = 0.1
    return {
        "embedding": jax.random.normal(ks[0], (O, H), jnp.float32) * s,
        "attn_W":    jax.random.normal(ks[1], (L, 2 * H), jnp.float32) * s,
        "attn_b":    jax.random.normal(ks[2], (L,), jnp.float32) * s,
        "comb_W":    jax.random.normal(ks[3], (H, 2 * H), jnp.float32) * s,
        "comb_b":    jax.random.normal(ks[4], (H,), jnp.float32) * s,
        "gru_Wih":   jax.random.normal(ks[5], (3 * H, H), jnp.float32) * s,
        "gru_Whh":   jax.random.normal(ks[6], (3 * H, H), jnp.float32) * s,
        "gru_bih":   jax.random.normal(ks[7], (3 * H,), jnp.float32) * s,
        "gru_bhh":   jax.random.normal(ks[8], (3 * H,), jnp.float32) * s,
        "out_W":     jax.random.normal(ks[9], (O, H), jnp.float32) * s,
        "out_b":     jnp.zeros((O,), jnp.float32),
    }


def pack_params(raw, hidden_size, output_size, max_length):
    """One-time preprocessing: transpose all weights to (in, out), fuse them
    into a block-diagonal emb/hid block and wide gate blocks, and pack all
    biases into one 128-lane-aligned vector."""
    H, O, L = hidden_size, output_size, max_length

    attn_W = raw["attn_W"]                                        # (L, 2H)
    w_attn_e, w_attn_h = attn_W[:, :H].T, attn_W[:, H:].T         # (H, L) each
    comb_W = raw["comb_W"]                                        # (H, 2H)
    w_comb_e, w_comb_a = comb_W[:, :H].T, comb_W[:, H:].T         # (H, H) each
    Wih, Whh = raw["gru_Wih"], raw["gru_Whh"]                     # (3H, H)
    w_ir, w_iz, w_in = Wih[:H].T, Wih[H:2 * H].T, Wih[2 * H:].T   # (H, H) each
    w_hr, w_hz, w_hn = Whh[:H].T, Whh[H:2 * H].T, Whh[2 * H:].T
    w_out = raw["out_W"].T                                        # (H, O)

    w_emb_blk = jnp.concatenate([w_attn_e, w_comb_e], axis=1)           # (H, L+H)
    w_hid_blk = jnp.concatenate([w_attn_h, w_hr, w_hz, w_hn], axis=1)   # (H, L+3H)
    # Block-diagonal fusion: one MXU pass for both emb- and hid-projections.
    w_cat = jnp.concatenate(
        [jnp.concatenate([w_emb_blk, jnp.zeros((H, L + 3 * H), jnp.float32)], axis=1),
         jnp.concatenate([jnp.zeros((H, L + H), jnp.float32), w_hid_blk], axis=1)],
        axis=0)                                                          # (2H, 2L+4H)
    w_x_blk = jnp.concatenate([w_ir, w_iz, w_in], axis=1)                # (H, 3H)

    bih, bhh = raw["gru_bih"], raw["gru_bhh"]
    seg_m1 = jnp.concatenate([raw["attn_b"], raw["comb_b"]])             # (L+H,)
    seg_x = jnp.concatenate([bih[:H] + bhh[:H],
                             bih[H:2 * H] + bhh[H:2 * H],
                             bih[2 * H:]])                               # (3H,)
    seg_hn = bhh[2 * H:]                                                 # (H,)
    seg_out = raw["out_b"]                                               # (O,)

    off_m1, off_x, off_hn, off_out, total = _bias_layout(H, O, L)
    bias = jnp.zeros((1, total), jnp.float32)
    bias = bias.at[0, off_m1:off_m1 + L + H].set(seg_m1)
    bias = bias.at[0, off_x:off_x + 3 * H].set(seg_x)
    bias = bias.at[0, off_hn:off_hn + H].set(seg_hn)
    bias = bias.at[0, off_out:off_out + O].set(seg_out)

    # NOTE: for larger models on v6e/v7x cast w_cat/w_x_blk/w_comb_a/w_out and
    # the encoder outputs to bfloat16 here (dots already accumulate f32), and
    # pad fused segments to 128-lane boundaries once H >= 128.
    return {
        "embedding": raw["embedding"],
        "w_cat": w_cat,
        "w_x_blk": w_x_blk,
        "w_comb_a": w_comb_a,
        "w_out": w_out,
        "bias": bias,
    }


# --------------------------------------------------------------------------
# Wrappers
# --------------------------------------------------------------------------
def attn_decoder_decode(packed, token_ids_tb, hidden, encoder_outputs_lbh,
                        *, hidden_size, output_size, max_length):
    """T teacher-forced AttnDecoderRNN.forward steps in ONE pallas_call.

    token_ids_tb:         (T, B)    int32
    hidden:               (1, B, H) float32
    encoder_outputs_lbh:  (L, B, H) float32 (PyTorch layout)
    returns (log_probs (T, B, O), final hidden (1, B, H), attn_weights (T, B, L))
    """
    H, O, L = hidden_size, output_size, max_length
    T, B = token_ids_tb.shape

    # Loop-invariant preprocessing, paid once per decoded sequence:
    #   all T embedding gathers in one XLA gather; batch-major encoder outputs.
    # TODO(synk): nn.Dropout(p=0.1) on the embedding is identity at inference;
    # training-mode dropout mask (pltpu.prng_*) is not implemented.
    emb_all = packed["embedding"][token_ids_tb]               # (T, B, H)
    enc_blh = jnp.transpose(encoder_outputs_lbh, (1, 0, 2))   # (B, L, H)
    hid0 = hidden[0]                                          # (B, H)

    off_m1, off_x, off_hn, off_out, bias_total = _bias_layout(H, O, L)
    out_w = _round_up(O + L, 128)                             # lane-dense slab width

    kernel = functools.partial(
        _attn_decoder_seq_kernel, H=H, O=O, L=L,
        off_m1=off_m1, off_x=off_x, off_hn=off_hn, off_out=off_out, out_w=out_w)

    grid_spec = pltpu.PrefetchScalarGridSpec(
        num_scalar_prefetch=0,
        grid=(T,),
        in_specs=[
            pl.BlockSpec((1, B, H), lambda t: (t, 0, 0)),            # embedded tokens / step
            pl.BlockSpec((B, H), lambda t: (0, 0)),                  # initial hidden (resident)
            pl.BlockSpec((B, L, H), lambda t: (0, 0, 0)),            # encoder outputs (resident)
            pl.BlockSpec((2 * H, 2 * L + 4 * H), lambda t: (0, 0)),  # block-diag emb|hid weights
            pl.BlockSpec((H, 3 * H), lambda t: (0, 0)),              # GRU input-gate weights
            pl.BlockSpec((H, H), lambda t: (0, 0)),                  # attn_combine (applied part)
            pl.BlockSpec((H, O), lambda t: (0, 0)),                  # out projection
            pl.BlockSpec((1, bias_total), lambda t: (0, 0)),         # packed biases
        ],
        out_specs=(
            pl.BlockSpec((1, B, out_w), lambda t: (t, 0, 0)),        # [logp | attn_w | pad]
            pl.BlockSpec((B, H), lambda t: (0, 0)),                  # final hidden
        ),
        scratch_shapes=[pltpu.VMEM((B, H), jnp.float32)],            # carried hidden state
    )

    slab, h_final = pl.pallas_call(
        kernel,
        grid_spec=grid_spec,
        out_shape=(
            jax.ShapeDtypeStruct((T, B, out_w), jnp.float32),
            jax.ShapeDtypeStruct((B, H), jnp.float32),
        ),
        compiler_params=pltpu.CompilerParams(
            dimension_semantics=("arbitrary",)),     # recurrent timestep axis
    )(emb_all, hid0, enc_blh,
      packed["w_cat"], packed["w_x_blk"], packed["w_comb_a"],
      packed["w_out"], packed["bias"])

    log_probs = slab[:, :, :O]
    attn_weights = slab[:, :, O:O + L]
    return log_probs, h_final[None], attn_weights


def attn_decoder_step(packed, token_ids, hidden, encoder_outputs_lbh,
                      *, hidden_size, output_size, max_length):
    """Exact equivalent of AttnDecoderRNN.forward (one timestep)."""
    logp, h, aw = attn_decoder_decode(
        packed, token_ids[None], hidden, encoder_outputs_lbh,
        hidden_size=hidden_size, output_size=output_size, max_length=max_length)
    return logp[0], h, aw[0]


# --------------------------------------------------------------------------
# Pure-JAX reference (mirrors the PyTorch module exactly)
# --------------------------------------------------------------------------
def _ref_step(raw, tok, hidden, enc_lbh, H):
    emb = raw["embedding"][tok]                                   # (B, H)
    eh = jnp.concatenate([emb, hidden[0]], axis=1)                # (B, 2H)
    attn_w = jax.nn.softmax(eh @ raw["attn_W"].T + raw["attn_b"], axis=1)
    enc_blh = jnp.transpose(enc_lbh, (1, 0, 2))                   # (B, L, H)
    applied = jnp.einsum("bl,blh->bh", attn_w, enc_blh)
    comb = jnp.concatenate([emb, applied], axis=1) @ raw["comb_W"].T + raw["comb_b"]
    x = jax.nn.relu(comb)
    gi = x @ raw["gru_Wih"].T + raw["gru_bih"]
    gh = hidden[0] @ raw["gru_Whh"].T + raw["gru_bhh"]
    r = jax.nn.sigmoid(gi[:, :H] + gh[:, :H])
    z = jax.nn.sigmoid(gi[:, H:2 * H] + gh[:, H:2 * H])
    n = jnp.tanh(gi[:, 2 * H:] + r * gh[:, 2 * H:])
    h_new = (1.0 - z) * n + z * hidden[0]
    logp = jax.nn.log_softmax(h_new @ raw["out_W"].T + raw["out_b"], axis=1)
    return logp, h_new[None], attn_w


def _ref_decode(raw, tokens_tb, hidden, enc_lbh, H):
    logps, attns = [], []
    h = hidden
    for t in range(tokens_tb.shape[0]):
        lp, h, aw = _ref_step(raw, tokens_tb[t], h, enc_lbh, H)
        logps.append(lp)
        attns.append(aw)
    return jnp.stack(logps), h, jnp.stack(attns)


# --------------------------------------------------------------------------
if __name__ == "__main__":
    hidden_size = 32     # H
    output_size = 16     # vocab / output_size
    max_length = 8       # L
    batch_size = 8       # B (multiple of the 8-sublane height)
    num_steps = 5        # T decode timesteps fused into one kernel launch

    key = jax.random.PRNGKey(0)
    k_params, k_tok, k_hid, k_enc = jax.random.split(key, 4)

    raw = init_raw_params(k_params, hidden_size, output_size, max_length)
    packed = pack_params(raw, hidden_size, output_size, max_length)

    token_ids = jax.random.randint(
        k_tok, (num_steps, batch_size), 0, output_size, jnp.int32)
    hidden = jax.random.normal(k_hid, (1, batch_size, hidden_size), jnp.float32)
    encoder_outputs = jax.random.normal(
        k_enc, (max_length, batch_size, hidden_size), jnp.float32)   # (L, B, H)

    decode = jax.jit(functools.partial(
        attn_decoder_decode, hidden_size=hidden_size,
        output_size=output_size, max_length=max_length))

    logp, new_hidden, attn_w = decode(packed, token_ids, hidden, encoder_outputs)
    jax.block_until_ready((logp, new_hidden, attn_w))

    assert logp.shape == (num_steps, batch_size, output_size)
    assert new_hidden.shape == (1, batch_size, hidden_size)
    assert attn_w.shape == (num_steps, batch_size, max_length)

    # Numerical check against a pure-JAX step-by-step reference.
    ref_lp, ref_h, ref_aw = jax.jit(
        functools.partial(_ref_decode, H=hidden_size))(
            raw, token_ids, hidden, encoder_outputs)
    jax.block_until_ready((ref_lp, ref_h, ref_aw))

    err_lp = float(jnp.max(jnp.abs(logp - ref_lp)))
    err_aw = float(jnp.max(jnp.abs(attn_w - ref_aw)))
    err_h = float(jnp.max(jnp.abs(new_hidden - ref_h)))
    assert err_lp < 5e-2 and err_aw < 5e-2 and err_h < 5e-2, (err_lp, err_aw, err_h)

    print("KERNEL_OK")
</pallas_src>

<mosaic_0001>
module attributes {stable_mosaic.version = 11 : i64} {
  func.func @_attn_decoder_seq_kernel(%arg0: i32, %arg1: memref<1x8x32xf32, #tpu.memory_space<vmem>>, %arg2: memref<8x32xf32, #tpu.memory_space<vmem>>, %arg3: memref<8x8x32xf32, #tpu.memory_space<vmem>>, %arg4: memref<64x144xf32, #tpu.memory_space<vmem>>, %arg5: memref<32x96xf32, #tpu.memory_space<vmem>>, %arg6: memref<32x32xf32, #tpu.memory_space<vmem>>, %arg7: memref<32x16xf32, #tpu.memory_space<vmem>>, %arg8: memref<1x512xf32, #tpu.memory_space<vmem>>, %arg9: memref<1x8x128xf32, #tpu.memory_space<vmem>>, %arg10: memref<8x32xf32, #tpu.memory_space<vmem>>, %arg11: memref<8x32xf32, #tpu.memory_space<vmem>>) attributes {dimension_semantics = [#tpu.dimension_semantics<arbitrary>], iteration_bounds = array<i64: 5>, scalar_prefetch = 0 : i64, scratch_operands = 1 : i64, tpu.core_type = #tpu.core_type<tc>, window_params = [{transform_indices = @transform_0, window_bounds = array<i64: 1, 8, 32>}, {pipeline_mode = #tpu.pipeline_mode<synchronous>, transform_indices = @transform_1, window_bounds = array<i64: 8, 32>}, {pipeline_mode = #tpu.pipeline_mode<synchronous>, transform_indices = @transform_2, window_bounds = array<i64: 8, 8, 32>}, {pipeline_mode = #tpu.pipeline_mode<synchronous>, transform_indices = @transform_3, window_bounds = array<i64: 64, 144>}, {pipeline_mode = #tpu.pipeline_mode<synchronous>, transform_indices = @transform_4, window_bounds = array<i64: 32, 96>}, {pipeline_mode = #tpu.pipeline_mode<synchronous>, transform_indices = @transform_5, window_bounds = array<i64: 32, 32>}, {pipeline_mode = #tpu.pipeline_mode<synchronous>, transform_indices = @transform_6, window_bounds = array<i64: 32, 16>}, {pipeline_mode = #tpu.pipeline_mode<synchronous>, transform_indices = @transform_7, window_bounds = array<i64: 1, 512>}, {transform_indices = @transform_8, window_bounds = array<i64: 1, 8, 128>}, {pipeline_mode = #tpu.pipeline_mode<synchronous>, transform_indices = @transform_9, window_bounds = array<i64: 8, 32>}]} {
    %c0_i32 = arith.constant 0 : i32
    %0 = arith.cmpi eq, %arg0, %c0_i32 : i32
    %1 = arith.extui %0 : i1 to i32
    %c0_i32_0 = arith.constant 0 : i32
    %2 = arith.cmpi ne, %1, %c0_i32_0 : i32
    scf.if %2 {
      %c0_40 = arith.constant 0 : index
      %c0_41 = arith.constant 0 : index
      %95 = vector.load %arg2[%c0_40, %c0_41] : memref<8x32xf32, #tpu.memory_space<vmem>>, vector<8x32xf32>
      %c0_42 = arith.constant 0 : index
      %c0_43 = arith.constant 0 : index
      %96 = vector.load %arg11[%c0_42, %c0_43] : memref<8x32xf32, #tpu.memory_space<vmem>>, vector<8x32xf32>
      tpu.vector_store %arg11[%c0_42, %c0_43], %95 {strides = array<i32>} : memref<8x32xf32, #tpu.memory_space<vmem>>, vector<8x32xf32>,
    } else {
    }
    %c0 = arith.constant 0 : index
    %c0_1 = arith.constant 0 : index
    %c0_2 = arith.constant 0 : index
    %3 = vector.load %arg1[%c0, %c0_1, %c0_2] : memref<1x8x32xf32, #tpu.memory_space<vmem>>, vector<1x8x32xf32>
    %4 = vector.shape_cast %3 : vector<1x8x32xf32> to vector<8x32xf32>
    %c0_3 = arith.constant 0 : index
    %c0_4 = arith.constant 0 : index
    %5 = vector.load %arg11[%c0_3, %c0_4] : memref<8x32xf32, #tpu.memory_space<vmem>>, vector<8x32xf32>
    %c0_5 = arith.constant 0 : index
    %c0_6 = arith.constant 0 : index
    %c0_7 = arith.constant 0 : index
    %6 = vector.load %arg3[%c0_5, %c0_6, %c0_7] : memref<8x8x32xf32, #tpu.memory_space<vmem>>, vector<8x8x32xf32>
    %c0_8 = arith.constant 0 : index
    %c0_9 = arith.constant 0 : index
    %7 = vector.load %arg8[%c0_8, %c0_9] : memref<1x512xf32, #tpu.memory_space<vmem>>, vector<1x40xf32>
    %c0_10 = arith.constant 0 : index
    %c128 = arith.constant 128 : index
    %8 = vector.load %arg8[%c0_10, %c128] : memref<1x512xf32, #tpu.memory_space<vmem>>, vector<1x96xf32>
    %c0_11 = arith.constant 0 : index
    %c256 = arith.constant 256 : index
    %9 = vector.load %arg8[%c0_11, %c256] : memref<1x512xf32, #tpu.memory_space<vmem>>, vector<1x32xf32>
    %c0_12 = arith.constant 0 : index
    %c384 = arith.constant 384 : index
    %10 = vector.load %arg8[%c0_12, %c384] : memref<1x512xf32, #tpu.memory_space<vmem>>, vector<1x16xf32>
    %11 = tpu.concatenate %4, %5 in 1 : vector<8x32xf32>, vector<8x32xf32> -> vector<8x64xf32>
    %c0_13 = arith.constant 0 : index
    %c0_14 = arith.constant 0 : index
    %12 = vector.load %arg4[%c0_13, %c0_14] : memref<64x144xf32, #tpu.memory_space<vmem>>, vector<64x144xf32>
    %cst = arith.constant dense<0.000000e+00> : vector<8x144xf32>
    %13 = tpu.matmul %11, %12, %cst {dimension_numbers = #tpu.dot_dimension_numbers<[1], [0], [0], [1], [0, 0, 1, 1], [], []>} : vector<8x64xf32>, vector<64x144xf32>, vector<8x144xf32> -> vector<8x144xf32>
    %14 = vector.extract_strided_slice %13 {offsets = [0, 0], sizes = [8, 40], strides = [1, 1]} : vector<8x144xf32> to vector<8x40xf32>
    %15 = vector.broadcast %7 : vector<1x40xf32> to vector<8x40xf32>
    %16 = arith.addf %14, %15 : vector<8x40xf32>
    %17 = vector.extract_strided_slice %13 {offsets = [0, 40], sizes = [8, 104], strides = [1, 1]} : vector<8x144xf32> to vector<8x104xf32>
    %18 = vector.extract_strided_slice %16 {offsets = [0, 0], sizes = [8, 8], strides = [1, 1]} : vector<8x40xf32> to vector<8x8xf32>
    %19 = vector.extract_strided_slice %17 {offsets = [0, 0], sizes = [8, 8], strides = [1, 1]} : vector<8x104xf32> to vector<8x8xf32>
    %20 = arith.addf %18, %19 : vector<8x8xf32>
    %cst_15 = arith.constant dense<0xFF800000> : vector<8xf32>
    %21 = vector.multi_reduction <maximumf>, %20, %cst_15 [1] : vector<8x8xf32> to vector<8xf32>
    %22 = vector.shape_cast %21 : vector<8xf32> to vector<8x1xf32>
    %23 = vector.broadcast %22 : vector<8x1xf32> to vector<8x8xf32>
    %24 = arith.subf %20, %23 : vector<8x8xf32>
    %25 = math.exp %24 : vector<8x8xf32>
    %cst_16 = arith.constant dense<0.000000e+00> : vector<8xf32>
    %26 = vector.multi_reduction <add>, %25, %cst_16 [1] : vector<8x8xf32> to vector<8xf32>
    %27 = vector.shape_cast %26 : vector<8xf32> to vector<8x1xf32>
    %28 = vector.broadcast %27 : vector<8x1xf32> to vector<8x8xf32>
    %29 = arith.divf %25, %28 : vector<8x8xf32>
    %30 = vector.shape_cast %29 : vector<8x8xf32> to vector<8x8x1xf32>
    %31 = vector.broadcast %30 : vector<8x8x1xf32> to vector<8x8x32xf32>
    %32 = arith.mulf %31, %6 : vector<8x8x32xf32>
    %cst_17 = arith.constant dense<0.000000e+00> : vector<8x32xf32>
    %33 = vector.multi_reduction <add>, %32, %cst_17 [1] : vector<8x8x32xf32> to vector<8x32xf32>
    %34 = vector.extract_strided_slice %16 {offsets = [0, 8], sizes = [8, 32], strides = [1, 1]} : vector<8x40xf32> to vector<8x32xf32>
    %c0_18 = arith.constant 0 : index
    %c0_19 = arith.constant 0 : index
    %35 = vector.load %arg6[%c0_18, %c0_19] : memref<32x32xf32, #tpu.memory_space<vmem>>, vector<32x32xf32>
    %cst_20 = arith.constant dense<0.000000e+00> : vector<8x32xf32>
    %36 = tpu.matmul %33, %35, %cst_20 {dimension_numbers = #tpu.dot_dimension_numbers<[1], [0], [0], [1], [0, 0, 1, 1], [], []>} : vector<8x32xf32>, vector<32x32xf32>, vector<8x32xf32> -> vector<8x32xf32>
    %37 = arith.addf %34, %36 : vector<8x32xf32>
    %cst_21 = arith.constant 0.000000e+00 : f32
    %38 = vector.broadcast %cst_21 : f32 to vector<8x32xf32>
    %39 = arith.maximumf %37, %38 : vector<8x32xf32>
    %c0_22 = arith.constant 0 : index
    %c0_23 = arith.constant 0 : index
    %40 = vector.load %arg5[%c0_22, %c0_23] : memref<32x96xf32, #tpu.memory_space<vmem>>, vector<32x96xf32>
    %cst_24 = arith.constant dense<0.000000e+00> : vector<8x96xf32>
    %41 = tpu.matmul %39, %40, %cst_24 {dimension_numbers = #tpu.dot_dimension_numbers<[1], [0], [0], [1], [0, 0, 1, 1], [], []>} : vector<8x32xf32>, vector<32x96xf32>, vector<8x96xf32> -> vector<8x96xf32>
    %42 = vector.broadcast %8 : vector<1x96xf32> to vector<8x96xf32>
    %43 = arith.addf %41, %42 : vector<8x96xf32>
    %44 = vector.extract_strided_slice %17 {offsets = [0, 8], sizes = [8, 32], strides = [1, 1]} : vector<8x104xf32> to vector<8x32xf32>
    %45 = vector.extract_strided_slice %17 {offsets = [0, 40], sizes = [8, 32], strides = [1, 1]} : vector<8x104xf32> to vector<8x32xf32>
    %46 = vector.extract_strided_slice %17 {offsets = [0, 72], sizes = [8, 32], strides = [1, 1]} : vector<8x104xf32> to vector<8x32xf32>
    %47 = vector.extract_strided_slice %43 {offsets = [0, 0], sizes = [8, 32], strides = [1, 1]} : vector<8x96xf32> to vector<8x32xf32>
    %48 = arith.addf %47, %44 : vector<8x32xf32>
    %49 = arith.negf %48 : vector<8x32xf32>
    %50 = math.exp %49 : vector<8x32xf32>
    %cst_25 = arith.constant 1.000000e+00 : f32
    %51 = vector.broadcast %cst_25 : f32 to vector<8x32xf32>
    %52 = arith.addf %51, %50 : vector<8x32xf32>
    %53 = arith.divf %51, %52 : vector<8x32xf32>
    %54 = vector.extract_strided_slice %43 {offsets = [0, 32], sizes = [8, 32], strides = [1, 1]} : vector<8x96xf32> to vector<8x32xf32>
    %55 = arith.addf %54, %45 : vector<8x32xf32>
    %56 = arith.negf %55 : vector<8x32xf32>
    %57 = math.exp %56 : vector<8x32xf32>
    %cst_26 = arith.constant 1.000000e+00 : f32
    %58 = vector.broadcast %cst_26 : f32 to vector<8x32xf32>
    %59 = arith.addf %58, %57 : vector<8x32xf32>
    %60 = arith.divf %58, %59 : vector<8x32xf32>
    %61 = vector.extract_strided_slice %43 {offsets = [0, 64], sizes = [8, 32], strides = [1, 1]} : vector<8x96xf32> to vector<8x32xf32>
    %62 = vector.broadcast %9 : vector<1x32xf32> to vector<8x32xf32>
    %63 = arith.addf %46, %62 : vector<8x32xf32>
    %64 = arith.mulf %53, %63 : vector<8x32xf32>
    %65 = arith.addf %61, %64 : vector<8x32xf32>
    %66 = math.tanh %65 : vector<8x32xf32>
    %cst_27 = arith.constant 1.000000e+00 : f32
    %67 = vector.broadcast %cst_27 : f32 to vector<8x32xf32>
    %68 = arith.subf %67, %60 : vector<8x32xf32>
    %69 = arith.mulf %68, %66 : vector<8x32xf32>
    %70 = arith.mulf %60, %5 : vector<8x32xf32>
    %71 = arith.addf %69, %70 : vector<8x32xf32>
    %c0_28 = arith.constant 0 : index
    %c0_29 = arith.constant 0 : index
    %72 = vector.load %arg11[%c0_28, %c0_29] : memref<8x32xf32, #tpu.memory_space<vmem>>, vector<8x32xf32>
    tpu.vector_store %arg11[%c0_28, %c0_29], %71 {strides = array<i32>} : memref<8x32xf32, #tpu.memory_space<vmem>>, vector<8x32xf32>,
    %c0_30 = arith.constant 0 : index
    %c0_31 = arith.constant 0 : index
    %73 = vector.load %arg7[%c0_30, %c0_31] : memref<32x16xf32, #tpu.memory_space<vmem>>, vector<32x16xf32>
    %cst_32 = arith.constant dense<0.000000e+00> : vector<8x16xf32>
    %74 = tpu.matmul %71, %73, %cst_32 {dimension_numbers = #tpu.dot_dimension_numbers<[1], [0], [0], [1], [0, 0, 1, 1], [], []>} : vector<8x32xf32>, vector<32x16xf32>, vector<8x16xf32> -> vector<8x16xf32>
    %75 = vector.broadcast %10 : vector<1x16xf32> to vector<8x16xf32>
    %76 = arith.addf %74, %75 : vector<8x16xf32>
    %cst_33 = arith.constant dense<0xFF800000> : vector<8xf32>
    %77 = vector.multi_reduction <maximumf>, %76, %cst_33 [1] : vector<8x16xf32> to vector<8xf32>
    %78 = vector.shape_cast %77 : vector<8xf32> to vector<8x1xf32>
    %79 = vector.broadcast %78 : vector<8x1xf32> to vector<8x16xf32>
    %80 = arith.subf %76, %79 : vector<8x16xf32>
    %81 = math.exp %80 : vector<8x16xf32>
    %cst_34 = arith.constant dense<0.000000e+00> : vector<8xf32>
    %82 = vector.multi_reduction <add>, %81, %cst_34 [1] : vector<8x16xf32> to vector<8xf32>
    %83 = vector.shape_cast %82 : vector<8xf32> to vector<8x1xf32>
    %84 = math.log %83 : vector<8x1xf32>
    %85 = vector.broadcast %84 : vector<8x1xf32> to vector<8x16xf32>
    %86 = arith.subf %80, %85 : vector<8x16xf32>
    %cst_35 = arith.constant 0.000000e+00 : f32
    %87 = vector.broadcast %cst_35 : f32 to vector<8x104xf32>
    %88 = tpu.concatenate %86, %29, %87 in 1 : vector<8x16xf32>, vector<8x8xf32>, vector<8x104xf32> -> vector<8x128xf32>
    %c0_36 = arith.constant 0 : index
    %c0_37 = arith.constant 0 : index
    %c0_38 = arith.constant 0 : index
    %89 = vector.load %arg9[%c0_36, %c0_37, %c0_38] : memref<1x8x128xf32, #tpu.memory_space<vmem>>, vector<1x8x128xf32>
    %90 = vector.shape_cast %89 : vector<1x8x128xf32> to vector<8x128xf32>
    %91 = vector.shape_cast %88 : vector<8x128xf32> to vector<1x8x128xf32>
    tpu.vector_store %arg9[%c0_36, %c0_37, %c0_38], %91 {strides = array<i32>} : memref<1x8x128xf32, #tpu.memory_space<vmem>>, vector<1x8x128xf32>,
    %c4_i32 = arith.constant 4 : i32
    %92 = arith.cmpi eq, %arg0, %c4_i32 : i32
    %93 = arith.extui %92 : i1 to i32
    %c0_i32_39 = arith.constant 0 : i32
    %94 = arith.cmpi ne, %93, %c0_i32_39 : i32
    scf.if %94 {
      %c0_40 = arith.constant 0 : index
      %c0_41 = arith.constant 0 : index
      %95 = vector.load %arg10[%c0_40, %c0_41] : memref<8x32xf32, #tpu.memory_space<vmem>>, vector<8x32xf32>
      tpu.vector_store %arg10[%c0_40, %c0_41], %71 {strides = array<i32>} : memref<8x32xf32, #tpu.memory_space<vmem>>, vector<8x32xf32>,
    } else {
    }
    return
  }
  func.func @transform_0(%arg0: i32) -> (i32, i32, i32) {
    %c0_i32 = arith.constant 0 : i32
    %c0_i32_0 = arith.constant 0 : i32
    %c0_i32_1 = arith.constant 0 : i32
    return %arg0, %c0_i32, %c0_i32_0 : i32, i32, i32
  }
  func.func @transform_1(%arg0: i32) -> (i32, i32) {
    %c0_i32 = arith.constant 0 : i32
    %c0_i32_0 = arith.constant 0 : i32
    %c0_i32_1 = arith.constant 0 : i32
    return %c0_i32, %c0_i32_0 : i32, i32
  }
  func.func @transform_2(%arg0: i32) -> (i32, i32, i32) {
    %c0_i32 = arith.constant 0 : i32
    %c0_i32_0 = arith.constant 0 : i32
    %c0_i32_1 = arith.constant 0 : i32
    %c0_i32_2 = arith.constant 0 : i32
    return %c0_i32, %c0_i32_0, %c0_i32_1 : i32, i32, i32
  }
  func.func @transform_3(%arg0: i32) -> (i32, i32) {
    %c0_i32 = arith.constant 0 : i32
    %c0_i32_0 = arith.constant 0 : i32
    %c0_i32_1 = arith.constant 0 : i32
    return %c0_i32, %c0_i32_0 : i32, i32
  }
  func.func @transform_4(%arg0: i32) -> (i32, i32) {
    %c0_i32 = arith.constant 0 : i32
    %c0_i32_0 = arith.constant 0 : i32
    %c0_i32_1 = arith.constant 0 : i32
    return %c0_i32, %c0_i32_0 : i32, i32
  }
  func.func @transform_5(%arg0: i32) -> (i32, i32) {
    %c0_i32 = arith.constant 0 : i32
    %c0_i32_0 = arith.constant 0 : i32
    %c0_i32_1 = arith.constant 0 : i32
    return %c0_i32, %c0_i32_0 : i32, i32
  }
  func.func @transform_6(%arg0: i32) -> (i32, i32) {
    %c0_i32 = arith.constant 0 : i32
    %c0_i32_0 = arith.constant 0 : i32
    %c0_i32_1 = arith.constant 0 : i32
    return %c0_i32, %c0_i32_0 : i32, i32
  }
  func.func @transform_7(%arg0: i32) -> (i32, i32) {
    %c0_i32 = arith.constant 0 : i32
    %c0_i32_0 = arith.constant 0 : i32
    %c0_i32_1 = arith.constant 0 : i32
    return %c0_i32, %c0_i32_0 : i32, i32
  }
  func.func @transform_8(%arg0: i32) -> (i32, i32, i32) {
    %c0_i32 = arith.constant 0 : i32
    %c0_i32_0 = arith.constant 0 : i32
    %c0_i32_1 = arith.constant 0 : i32
    return %arg0, %c0_i32, %c0_i32_0 : i32, i32, i32
  }
  func.func @transform_9(%arg0: i32) -> (i32, i32) {
    %c0_i32 = arith.constant 0 : i32
    %c0_i32_0 = arith.constant 0 : i32
    %c0_i32_1 = arith.constant 0 : i32
    return %c0_i32, %c0_i32_0 : i32, i32
  }
}

</mosaic_0001>

<llo_original>
// kernel: attn_decoder_decode.1
$region0: #{attn_decoder_decode.1}
  #allocation0 [shape = 'u32[]', space=smem, size = 0x4, offset = 0x4, fixed_abs, tag = 'smem constant byte address 0x4 - core index']
  #allocation1 [shape = 'u32[144,128]{1,0:T(1,128)}', space=vmem, size = 0x12000, scoped, tag = 'internal scratch']
  #allocation2 [shape = 'f32[8,32]{1,0:T(8,128)}', space=vmem, size = 0x1000, scoped, tag = 'scratch operand']
  %s0 = inlined_call_operand.vmem [shape: f32[5,8,32], index: 0, kind: input, shape index: {}]
  %s1 = inlined_call_operand.vmem [shape: f32[8,32], index: 1, kind: input, shape index: {}]
  %s2 = inlined_call_operand.vmem [shape: f32[8,8,32], index: 2, kind: input, shape index: {}]
  %s3 = inlined_call_operand.vmem [shape: f32[64,144], index: 3, kind: input, shape index: {}]
  %s4 = inlined_call_operand.vmem [shape: f32[32,96], index: 4, kind: input, shape index: {}]
  %s5 = inlined_call_operand.vmem [shape: f32[32,32], index: 5, kind: input, shape index: {}]
  %s6 = inlined_call_operand.vmem [shape: f32[32,16], index: 6, kind: input, shape index: {}]
  %s7 = inlined_call_operand.vmem [shape: f32[1,512], index: 7, kind: input, shape index: {}]
  %s8 = inlined_call_operand.vmem [shape: f32[5,8,128], index: 8, kind: output, shape index: {0}]
  %s9 = inlined_call_operand.hbm [shape: f32[8,32], index: 9, kind: output, shape index: {1}]
  %10 = xla_tuple %s8, %s9
  %s11 = sld [smem:[#allocation0]]
  $region81: #{attn_decoder_decode.1} parent=0
    _
  %s13 = ssub.s32 1, %s11
  %s14 = scalar_select 0, %s13, %s11
  $region1: #{attn_decoder_decode.1} parent=0
    #allocation3 [shape = 'u8[4096]{0}', space=vmem, size = 0x1000, scoped, tag = 'output window, operand 1, single buffered']
    #allocation4 [shape = 's32[2]{0}', space=sflag, size = 0x8, scoped, tag = 'scoped memory for attn_decoder_decode.1']
    %15 = vsyncpa [#allocation4], 0
    loop: start=0, step=1, limit=7
    $region2: #{attn_decoder_decode.1} parent=1 // loop_pre_header
      _
    $region3: #{attn_decoder_decode.1} parent=1 // loop_header
      %s17 = sphi 0, %s21
      %p18 = scmp.ge.s32.totalorder %s17, 7
      %s27 = sphi 0, %s29
      %s30 = sphi 0, %s27
      %s31 = sphi 0, %s30
      %s47 = sphi 0, %s31
      %s51 = sphi 0, %s51
      %s53 = sphi 0, %s51
      %s54 = sphi 0, %s53
      %s68 = sphi 0, %s54
      %s72 = sphi 0, %s72
      %s74 = sphi 0, %s72
      %s75 = sphi 0, %s74
      %s89 = sphi 0, %s75
      %s93 = sphi 0, %s93
      %s95 = sphi 0, %s93
      %s96 = sphi 0, %s95
      %s110 = sphi 0, %s96
      %s114 = sphi 0, %s114
      %s116 = sphi 0, %s114
      %s117 = sphi 0, %s116
      %s131 = sphi 0, %s117
      %s135 = sphi 0, %s135
      %s137 = sphi 0, %s135
      %s138 = sphi 0, %s137
      %s152 = sphi 0, %s138
      %s156 = sphi 0, %s156
      %s158 = sphi 0, %s156
      %s159 = sphi 0, %s158
      %s173 = sphi 0, %s159
      %s177 = sphi 0, %s177
      %s179 = sphi 0, %s177
      %s180 = sphi 0, %s179
      %s194 = sphi 0, %s180
      %s200 = sphi 0, %s202
      %s203 = sphi 0, %s200
      %s204 = sphi 0, %s203
      %s220 = sphi 0, %s204
      %s224 = sphi 0, %s224
      %s226 = sphi 0, %s224
      %s227 = sphi 0, %s226
      %s241 = sphi 0, %s227
    $region4: #{attn_decoder_decode.1} parent=1 // loop_header_branch
      %20 = sbr.rel (%p18) target = $region8
    $region5: #{attn_decoder_decode.1} parent=1 // loop_body
      %s22 = ssub.s32 %s17, 1
      %s23 = ssub.s32 %s17, 2
      %s24 = sadd.s32 %s17, 1
      %s25 = ssub.s32 %s17, %s24
      %p26 = scmp.eq.s32.totalorder %s25, 0
      %s28 = sadd.s32 %s27, 1
      %s29 = scalar_select %p26, %s27, %s28
      %p32 = pneg %p26
      %p33 = scmp.eq.s32.totalorder %s17, 4
      %p34 = por %p32, %p33
      %p35 = scmp.ne.s32.totalorder %s27, %s30
      %p36 = scmp.eq.s32.totalorder %s17, 0
      %p37 = por %p35, %p36
      %p38 = scmp.ne.s32.totalorder %s27, %s30
      %p39 = scmp.eq.s32.totalorder %s22, 4
      %p40 = por %p38, %p39
      %p41 = scmp.ne.s32.totalorder %s30, %s31
      %p42 = scmp.eq.s32.totalorder %s22, 0
      %p43 = por %p41, %p42
      %p44 = scmp.ne.s32.totalorder %s30, %s31
      %p45 = scmp.eq.s32.totalorder %s23, 4
      %p46 = por %p44, %p45
      %p48 = scmp.ne.s32.totalorder %s31, %s47
      %p49 = scmp.eq.s32.totalorder %s23, 0
      %p50 = por %p48, %p49
      %s52 = sadd.s32 %s51, 1
      %p55 = scmp.eq.s32.totalorder %s17, 4
      %p56 = scmp.ne.s32.totalorder %s51, %s53
      %p57 = scmp.eq.s32.totalorder %s17, 0
      %p58 = por %p56, %p57
      %p59 = scmp.ne.s32.totalorder %s51, %s53
      %p60 = scmp.eq.s32.totalorder %s22, 4
      %p61 = por %p59, %p60
      %p62 = scmp.ne.s32.totalorder %s53, %s54
      %p63 = scmp.eq.s32.totalorder %s22, 0
      %p64 = por %p62, %p63
      %p65 = scmp.ne.s32.totalorder %s53, %s54
      %p66 = scmp.eq.s32.totalorder %s23, 4
      %p67 = por %p65, %p66
      %p69 = scmp.ne.s32.totalorder %s54, %s68
      %p70 = scmp.eq.s32.totalorder %s23, 0
      %p71 = por %p69, %p70
      %s73 = sadd.s32 %s72, 1
      %p76 = scmp.eq.s32.totalorder %s17, 4
      %p77 = scmp.ne.s32.totalorder %s72, %s74
      %p78 = scmp.eq.s32.totalorder %s17, 0
      %p79 = por %p77, %p78
      %p80 = scmp.ne.s32.totalorder %s72, %s74
      %p81 = scmp.eq.s32.totalorder %s22, 4
      %p82 = por %p80, %p81
      %p83 = scmp.ne.s32.totalorder %s74, %s75
      %p84 = scmp.eq.s32.totalorder %s22, 0
      %p85 = por %p83, %p84
      %p86 = scmp.ne.s32.totalorder %s74, %s75
      %p87 = scmp.eq.s32.totalorder %s23, 4
      %p88 = por %p86, %p87
      %p90 = scmp.ne.s32.totalorder %s75, %s89
      %p91 = scmp.eq.s32.totalorder %s23, 0
      %p92 = por %p90, %p91
      %s94 = sadd.s32 %s93, 1
      %p97 = scmp.eq.s32.totalorder %s17, 4
      %p98 = scmp.ne.s32.totalorder %s93, %s95
      %p99 = scmp.eq.s32.totalorder %s17, 0
      %p100 = por %p98, %p99
      %p101 = scmp.ne.s32.totalorder %s93, %s95
      %p102 = scmp.eq.s32.totalorder %s22, 4
      %p103 = por %p101, %p102
      %p104 = scmp.ne.s32.totalorder %s95, %s96
      %p105 = scmp.eq.s32.totalorder %s22, 0
      %p106 = por %p104, %p105
      %p107 = scmp.ne.s32.totalorder %s95, %s96
      %p108 = scmp.eq.s32.totalorder %s23, 4
      %p109 = por %p107, %p108
      %p111 = scmp.ne.s32.totalorder %s96, %s110
      %p112 = scmp.eq.s32.totalorder %s23, 0
      %p113 = por %p111, %p112
      %s115 = sadd.s32 %s114, 1
      %p118 = scmp.eq.s32.totalorder %s17, 4
      %p119 = scmp.ne.s32.totalorder %s114, %s116
      %p120 = scmp.eq.s32.totalorder %s17, 0
      %p121 = por %p119, %p120
      %p122 = scmp.ne.s32.totalorder %s114, %s116
      %p123 = scmp.eq.s32.totalorder %s22, 4
      %p124 = por %p122, %p123
      %p125 = scmp.ne.s32.totalorder %s116, %s117
      %p126 = scmp.eq.s32.totalorder %s22, 0
      %p127 = por %p125, %p126
      %p128 = scmp.ne.s32.totalorder %s116, %s117
      %p129 = scmp.eq.s32.totalorder %s23, 4
      %p130 = por %p128, %p129
      %p132 = scmp.ne.s32.totalorder %s117, %s131
      %p133 = scmp.eq.s32.totalorder %s23, 0
      %p134 = por %p132, %p133
      %s136 = sadd.s32 %s135, 1
      %p139 = scmp.eq.s32.totalorder %s17, 4
      %p140 = scmp.ne.s32.totalorder %s135, %s137
      %p141 = scmp.eq.s32.totalorder %s17, 0
      %p142 = por %p140, %p141
      %p143 = scmp.ne.s32.totalorder %s135, %s137
      %p144 = scmp.eq.s32.totalorder %s22, 4
      %p145 = por %p143, %p144
      %p146 = scmp.ne.s32.totalorder %s137, %s138
      %p147 = scmp.eq.s32.totalorder %s22, 0
      %p148 = por %p146, %p147
      %p149 = scmp.ne.s32.totalorder %s137, %s138
      %p150 = scmp.eq.s32.totalorder %s23, 4
      %p151 = por %p149, %p150
      %p153 = scmp.ne.s32.totalorder %s138, %s152
      %p154 = scmp.eq.s32.totalorder %s23, 0
      %p155 = por %p153, %p154
      %s157 = sadd.s32 %s156, 1
      %p160 = scmp.eq.s32.totalorder %s17, 4
      %p161 = scmp.ne.s32.totalorder %s156, %s158
      %p162 = scmp.eq.s32.totalorder %s17, 0
      %p163 = por %p161, %p162
      %p164 = scmp.ne.s32.totalorder %s156, %s158
      %p165 = scmp.eq.s32.totalorder %s22, 4
      %p166 = por %p164, %p165
      %p167 = scmp.ne.s32.totalorder %s158, %s159
      %p168 = scmp.eq.s32.totalorder %s22, 0
      %p169 = por %p167, %p168
      %p170 = scmp.ne.s32.totalorder %s158, %s159
      %p171 = scmp.eq.s32.totalorder %s23, 4
      %p172 = por %p170, %p171
      %p174 = scmp.ne.s32.totalorder %s159, %s173
      %p175 = scmp.eq.s32.totalorder %s23, 0
      %p176 = por %p174, %p175
      %s178 = sadd.s32 %s177, 1
      %p181 = scmp.eq.s32.totalorder %s17, 4
      %p182 = scmp.ne.s32.totalorder %s177, %s179
      %p183 = scmp.eq.s32.totalorder %s17, 0
      %p184 = por %p182, %p183
      %p185 = scmp.ne.s32.totalorder %s177, %s179
      %p186 = scmp.eq.s32.totalorder %s22, 4
      %p187 = por %p185, %p186
      %p188 = scmp.ne.s32.totalorder %s179, %s180
      %p189 = scmp.eq.s32.totalorder %s22, 0
      %p190 = por %p188, %p189
      %p191 = scmp.ne.s32.totalorder %s179, %s180
      %p192 = scmp.eq.s32.totalorder %s23, 4
      %p193 = por %p191, %p192
      %p195 = scmp.ne.s32.totalorder %s180, %s194
      %p196 = scmp.eq.s32.totalorder %s23, 0
      %p197 = por %p195, %p196
      %s198 = ssub.s32 %s17, %s24
      %p199 = scmp.eq.s32.totalorder %s198, 0
      %s201 = sadd.s32 %s200, 1
      %s202 = scalar_select %p199, %s200, %s201
      %p205 = pneg %p199
      %p206 = scmp.eq.s32.totalorder %s17, 4
      %p207 = por %p205, %p206
      %p208 = scmp.ne.s32.totalorder %s200, %s203
      %p209 = scmp.eq.s32.totalorder %s17, 0
      %p210 = por %p208, %p209
      %p211 = scmp.ne.s32.totalorder %s200, %s203
      %p212 = scmp.eq.s32.totalorder %s22, 4
      %p213 = por %p211, %p212
      %p214 = scmp.ne.s32.totalorder %s203, %s204
      %p215 = scmp.eq.s32.totalorder %s22, 0
      %p216 = por %p214, %p215
      %p217 = scmp.ne.s32.totalorder %s203, %s204
      %p218 = scmp.eq.s32.totalorder %s23, 4
      %p219 = por %p217, %p218
      %p221 = scmp.ne.s32.totalorder %s204, %s220
      %p222 = scmp.eq.s32.totalorder %s23, 0
      %p223 = por %p221, %p222
      %s225 = sadd.s32 %s224, 1
      %p228 = scmp.eq.s32.totalorder %s17, 4
      %p229 = scmp.ne.s32.totalorder %s224, %s226
      %p230 = scmp.eq.s32.totalorder %s17, 0
      %p231 = por %p229, %p230
      %p232 = scmp.ne.s32.totalorder %s224, %s226
      %p233 = scmp.eq.s32.totalorder %s22, 4
      %p234 = por %p232, %p233
      %p235 = scmp.ne.s32.totalorder %s226, %s227
      %p236 = scmp.eq.s32.totalorder %s22, 0
      %p237 = por %p235, %p236
      %p238 = scmp.ne.s32.totalorder %s226, %s227
      %p239 = scmp.eq.s32.totalorder %s23, 4
      %p240 = por %p238, %p239
      %p242 = scmp.ne.s32.totalorder %s227, %s241
      %p243 = scmp.eq.s32.totalorder %s23, 0
      %p244 = por %p242, %p243
      %p245 = scmp.le.s32.totalorder 1, %s17
      %p246 = scmp.lt.s32.totalorder %s17, 6
      %p247 = pnand %p245, %p246
      %p248 = pneg %p247
      // Predicated region
      $region9: #{attn_decoder_decode.1} parent=5 // pred_check
        _
      $region10: #{attn_decoder_decode.1} parent=5 // pred_check_branch
        %250 = sbr.rel (%p247) target = $region12
      $region11: #{attn_decoder_decode.1} parent=5 // pred_region
        %s251 = ssub.s32 %s17, 1
        // Predicated region
        $region13: #{attn_decoder_decode.1} parent=11 // pred_check
          %p252 = pneg %p64
        $region14: #{attn_decoder_decode.1} parent=11 // pred_check_branch
          %254 = sbr.rel (%p252) target = $region16
        $region15: #{attn_decoder_decode.1} parent=11 // pred_region
          _
        $region16: #{attn_decoder_decode.1} parent=11 // pred_fallthru
          _
        // Predicated region
        $region17: #{attn_decoder_decode.1} parent=11 // pred_check
          %p255 = pneg %p85
        $region18: #{attn_decoder_decode.1} parent=11 // pred_check_branch
          %257 = sbr.rel (%p255) target = $region20
        $region19: #{attn_decoder_decode.1} parent=11 // pred_region
          _
        $region20: #{attn_decoder_decode.1} parent=11 // pred_fallthru
          _
        // Predicated region
        $region21: #{attn_decoder_decode.1} parent=11 // pred_check
          %p258 = pneg %p106
        $region22: #{attn_decoder_decode.1} parent=11 // pred_check_branch
          %260 = sbr.rel (%p258) target = $region24
        $region23: #{attn_decoder_decode.1} parent=11 // pred_region
          _
        $region24: #{attn_decoder_decode.1} parent=11 // pred_fallthru
          _
        // Predicated region
        $region25: #{attn_decoder_decode.1} parent=11 // pred_check
          %p261 = pneg %p127
        $region26: #{attn_decoder_decode.1} parent=11 // pred_check_branch
          %263 = sbr.rel (%p261) target = $region28
        $region27: #{attn_decoder_decode.1} parent=11 // pred_region
          _
        $region28: #{attn_decoder_decode.1} parent=11 // pred_fallthru
          _
        // Predicated region
        $region29: #{attn_decoder_decode.1} parent=11 // pred_check
          %p264 = pneg %p148
        $region30: #{attn_decoder_decode.1} parent=11 // pred_check_branch
          %266 = sbr.rel (%p264) target = $region32
        $region31: #{attn_decoder_decode.1} parent=11 // pred_region
          _
        $region32: #{attn_decoder_decode.1} parent=11 // pred_fallthru
          _
        // Predicated region
        $region33: #{attn_decoder_decode.1} parent=11 // pred_check
          %p267 = pneg %p169
        $region34: #{attn_decoder_decode.1} parent=11 // pred_check_branch
          %269 = sbr.rel (%p267) target = $region36
        $region35: #{attn_decoder_decode.1} parent=11 // pred_region
          _
        $region36: #{attn_decoder_decode.1} parent=11 // pred_fallthru
          _
        // Predicated region
        $region37: #{attn_decoder_decode.1} parent=11 // pred_check
          %p270 = pneg %p190
        $region38: #{attn_decoder_decode.1} parent=11 // pred_check_branch
          %272 = sbr.rel (%p270) target = $region40
        $region39: #{attn_decoder_decode.1} parent=11 // pred_region
          _
        $region40: #{attn_decoder_decode.1} parent=11 // pred_fallthru
          _
      $region12: #{attn_decoder_decode.1} parent=5 // pred_fallthru
        _
      %p273 = scmp.lt.s32.totalorder %s17, 5
      // Predicated region
      $region41: #{attn_decoder_decode.1} parent=5 // pred_check
        %p274 = pneg %p273
      $region42: #{attn_decoder_decode.1} parent=5 // pred_check_branch
        %276 = sbr.rel (%p274) target = $region44
      $region43: #{attn_decoder_decode.1} parent=5 // pred_region
        // Predicated region
        $region45: #{attn_decoder_decode.1} parent=43 // pred_check
          %p277 = pneg %p37
        $region46: #{attn_decoder_decode.1} parent=43 // pred_check_branch
          %279 = sbr.rel (%p277) target = $region48
        $region47: #{attn_decoder_decode.1} parent=43 // pred_region
          %p280 = scmp.lt.s32.totalorder %s17, 4
          %s281 = scalar_select %p280, %s17, 4
          %s282 = smul.addr %s281, 8
          %s283 = scalar_lea.vmem %s0, %s282
        $region48: #{attn_decoder_decode.1} parent=43 // pred_fallthru
          _
      $region44: #{attn_decoder_decode.1} parent=5 // pred_fallthru
        _
      %p284 = scmp.le.s32.totalorder 1, %s17
      %p285 = scmp.lt.s32.totalorder %s17, 6
      %p286 = pnand %p284, %p285
      %p287 = pneg %p286
      // Predicated region
      $region49: #{attn_decoder_decode.1} parent=5 // pred_check
        _
      $region50: #{attn_decoder_decode.1} parent=5 // pred_check_branch
        %289 = sbr.rel (%p286) target = $region52
      $region51: #{attn_decoder_decode.1} parent=5 // pred_region
        %s290 = ssub.s32 %s17, 1
        %p291 = scmp.lt.s32.totalorder %s22, 4
        %s292 = scalar_select %p291, %s22, 4
        %s293 = smul.addr %s292, 8
        %s294 = scalar_lea.vmem %s0, %s293
        %p295 = pneg %p43
        %p296 = pneg %p40
        %p297 = pneg %p64
        %p298 = pneg %p61
        %p299 = pneg %p85
        %p300 = pneg %p82
        %p301 = pneg %p106
        %p302 = pneg %p103
        %p303 = pneg %p127
        %p304 = pneg %p124
        %p305 = pneg %p148
        %p306 = pneg %p145
        %p307 = pneg %p169
        %p308 = pneg %p166
        %p309 = pneg %p190
        %p310 = pneg %p187
        %p311 = pneg %p216
        %p312 = pneg %p213
        %p313 = scmp.lt.s32.totalorder %s22, 4
        %s314 = scalar_select %p313, %s22, 4
        %s315 = smul.addr %s314, 8
        %s316 = scalar_lea.vmem %s8, %s315
        %p317 = pneg %p237
        %p318 = pneg %p234
        %p319 = scmp.lt.s32.totalorder %s22, 4
        %s320 = scalar_select %p319, %s22, 4
        %s321 = smul.addr %s320, 8
        %s322 = scalar_lea.vmem %s0, %s321
        %p323 = scmp.lt.s32.totalorder %s22, 4
        %s324 = scalar_select %p323, %s22, 4
        %s325 = smul.addr %s324, 8
        %s326 = scalar_lea.vmem %s8, %s325
        %p327 = scmp.eq.s32.totalorder %s22, 0
        // Predicated region
        $region53: #{attn_decoder_decode.1} parent=51 // pred_check
          %p328 = pneg %p327
        $region54: #{attn_decoder_decode.1} parent=51 // pred_check_branch
          %330 = sbr.rel (%p328) target = $region56
        $region55: #{attn_decoder_decode.1} parent=51 // pred_region
          %v331 = vld [vmem:[%s1] sm:$0xff]
          %vm332 = vcmask 261120
          %333 = vst.msk [vmem:[#allocation2] sm:$0xff] %vm332, %v331
        $region56: #{attn_decoder_decode.1} parent=51 // pred_fallthru
          _
        %v334 = vld [vmem:[%s322] sm:$0xff]
        %v335 = vld [vmem:[#allocation2] sm:$0xff]
        %v336 = vld [vmem:[%s2] sm:$0xff]
        %v337 = vld [vmem:[%s2 + $0x8] sm:$0xff]
        %v338 = vld [vmem:[%s2 + $0x10] sm:$0xff]
        %v339 = vld [vmem:[%s2 + $0x18] sm:$0xff]
        %v340 = vld [vmem:[%s2 + $0x20] sm:$0xff]
        %v341 = vld [vmem:[%s2 + $0x28] sm:$0xff]
        %v342 = vld [vmem:[%s2 + $0x30] sm:$0xff]
        %v343 = vld [vmem:[%s2 + $0x38] sm:$0xff]
        %v344 = vld [vmem:[%s7] sm:$0x1]
        %v345 = vld [vmem:[%s7 + $0x1] sm:$0x1]
        %v346 = vld [vmem:[%s7 + $0x2] sm:$0x1]
        %v347 = vld [vmem:[%s7 + $0x3] sm:$0x1]
        %349 = vrot.lane.b32.xlu0 %v335, 32
        %v350 = vpop.permute.xlu0 %349
        %vm352 = vcmask 261120
        %v353 = vsel %vm352, %v334, %v350
        %v354 = vld [vmem:[%s3] sm:$0xff]
        %v355 = vld [vmem:[%s3 + $0x8] sm:$0xff]
        %v356 = vld [vmem:[%s3 + $0x10] sm:$0xff]
        %v357 = vld [vmem:[%s3 + $0x18] sm:$0xff]
        %v358 = vld [vmem:[%s3 + $0x20] sm:$0xff]
        %v359 = vld [vmem:[%s3 + $0x28] sm:$0xff]
        %v360 = vld [vmem:[%s3 + $0x30] sm:$0xff]
        %v361 = vld [vmem:[%s3 + $0x38] sm:$0xff]
        %v362 = vld [vmem:[%s3 + $0x40] sm:$0xff]
        %v363 = vld [vmem:[%s3 + $0x48] sm:$0xff]
        %v364 = vld [vmem:[%s3 + $0x50] sm:$0xff]
        %v365 = vld [vmem:[%s3 + $0x58] sm:$0xff]
        %v366 = vld [vmem:[%s3 + $0x60] sm:$0xff]
        %v367 = vld [vmem:[%s3 + $0x68] sm:$0xff]
        %v368 = vld [vmem:[%s3 + $0x70] sm:$0xff]
        %v369 = vld [vmem:[%s3 + $0x78] sm:$0xff]
        %vm370 = vcmask 523264
        %v372 = vsel %vm370, %v353, 0
        %374 = vmatprep.subr.mxu0 %v355
        %375 = vmatpush1.msra.mxu0 %v354
        %376 = vmatprep.subr.mxu0 %v357
        %377 = vmatpush1.msra.mxu0 %v356
        %378 = vmatprep.subr.mxu0 %v359
        %379 = vmatpush1.msra.mxu0 %v358
        %380 = vmatprep.subr.mxu0 %v361
        %381 = vmatpush1.msra.mxu0 %v360
        %382 = vmatprep.subr.mxu0 %v363
        %383 = vmatpush1.msra.mxu0 %v362
        %384 = vmatprep.subr.mxu0 %v365
        %385 = vmatpush1.msra.mxu0 %v364
        %386 = vmatprep.subr.mxu0 %v367
        %387 = vmatpush1.msra.mxu0 %v366
        %388 = vmatprep.subr.mxu0 %v369
        %389 = vmatpush1.msra.mxu0 %v368
        %390 = vmatprep.subr.mxu0 0.0
        %391 = vmatpush1.msra.mxu0 0.0
        %392 = vmatprep.subr.mxu0 0.0
        %393 = vmatpush1.msra.mxu0 0.0
        %394 = vmatprep.subr.mxu0 0.0
        %395 = vmatpush1.msra.mxu0 0.0
        %396 = vmatprep.subr.mxu0 0.0
        %397 = vmatpush1.msra.mxu0 0.0
        %398 = vmatprep.subr.mxu0 0.0
        %399 = vmatpush1.msra.mxu0 0.0
        %400 = vmatprep.subr.mxu0 0.0
        %401 = vmatpush1.msra.mxu0 0.0
        %402 = vmatprep.subr.mxu0 0.0
        %403 = vmatpush1.msra.mxu0 0.0
        %404 = vmatprep.subr.mxu0 0.0
        %405 = vmatpush1.msra.mxu0 0.0
        %406 = vmatprep.subr.mxu0 0.0
        %407 = vmatpush1.msra.mxu0 0.0
        %408 = vmatprep.subr.mxu0 0.0
        %409 = vmatpush1.msra.mxu0 0.0
        %410 = vmatprep.subr.mxu0 0.0
        %411 = vmatpush1.msra.mxu0 0.0
        %412 = vmatprep.subr.mxu0 0.0
        %413 = vmatpush1.msra.mxu0 0.0
        %414 = vmatprep.subr.mxu0 0.0
        %415 = vmatpush1.msra.mxu0 0.0
        %416 = vmatprep.subr.mxu0 0.0
        %417 = vmatpush1.msra.mxu0 0.0
        %418 = vmatprep.subr.mxu0 0.0
        %419 = vmatpush1.msra.mxu0 0.0
        %420 = vmatprep.subr.mxu0 0.0
        %421 = vmatpush1.msra.mxu0 0.0
        %422 = vmatprep.subr.mxu0 0.0
        %423 = vmatpush1.msra.mxu0 0.0
        %424 = vmatprep.subr.mxu0 0.0
        %425 = vmatpush1.msra.mxu0 0.0
        %426 = vmatprep.subr.mxu0 0.0
        %427 = vmatpush1.msra.mxu0 0.0
        %428 = vmatprep.subr.mxu0 0.0
        %429 = vmatpush1.msra.mxu0 0.0
        %430 = vmatprep.subr.mxu0 0.0
        %431 = vmatpush1.msra.mxu0 0.0
        %432 = vmatprep.subr.mxu0 0.0
        %433 = vmatpush1.msra.mxu0 0.0
        %434 = vmatprep.subr.mxu0 0.0
        %435 = vmatpush1.msra.mxu0 0.0
        %436 = vmatprep.subr.mxu0 0.0
        %437 = vmatpush1.msra.mxu0 0.0
        %438 = vmatprep.mubr.f32.mxu0 0.0
        %439 = vmatmul.mubr.f32.gmra.mrb[0].mxu0 %v372
        %v440 = vpop.f32.mrb[0].mxu0
        %v441 = vadd.f32 0.0, %v440
        %v442 = vpop.f32.mrb[0].mxu0
        %v443 = vadd.f32 0.0, %v442
        %444 = vdwg.mxu0
        %v446 = vlaneseq
        %v447 = vshrl.u32 %v446, 7
        %v448 = vsub.s32 0, %v447
        %v449 = vrot.slane %v344, %v448
        %v451 = vadd.f32 %v441, %v449
        %453 = vrot.lane.b32.xlu0 %v441, 88
        %v454 = vpop.permute.xlu0 %453
        %v456 = vadd.f32 %v451, %v454
        %vm457 = vcmask 64512
        %v458 = vsel %vm457, %v456, -inf
        %459 = vmax.xlane.f32.xlu0 %v458
        %v460 = vpop.xlane.xlu0 %459
        %v461 = vsub.f32 %v456, %v460
        %v462 = vmul.f32 %v461, 1.442695
        %v463 = vpow.pop %v462
        %v464 = vsel %vm457, %v463, 0.0
        %465 = vadd.xlane.f32.xlu0 %v464
        %v466 = vpop.xlane.xlu0 %465
        %v467 = vrcp.pop %v466
        %v468 = vmul.f32 %v463, %v467
        %v469 = vlaneseq
        %v470 = vshrl.u32 %v469, 7
        %v471 = vsub.s32 0, %v470
        %v472 = vrot.slane %v468, %v471
        %474 = vbcast.lane.b32.xlu0 %v472, 256
        %v475 = vpop.permute.xlu0 %474
        %v476 = vlaneseq
        %v477 = vshrl.u32 %v476, 7
        %v478 = vsub.s32 1, %v477
        %v479 = vrot.slane %v468, %v478
        %481 = vbcast.lane.b32.xlu0 %v479, 256
        %v482 = vpop.permute.xlu0 %481
        %v483 = vlaneseq
        %v484 = vshrl.u32 %v483, 7
        %v485 = vsub.s32 2, %v484
        %v486 = vrot.slane %v468, %v485
        %488 = vbcast.lane.b32.xlu0 %v486, 256
        %v489 = vpop.permute.xlu0 %488
        %v490 = vlaneseq
        %v491 = vshrl.u32 %v490, 7
        %v492 = vsub.s32 3, %v491
        %v493 = vrot.slane %v468, %v492
        %495 = vbcast.lane.b32.xlu0 %v493, 256
        %v496 = vpop.permute.xlu0 %495
        %v497 = vlaneseq
        %v498 = vshrl.u32 %v497, 7
        %v499 = vsub.s32 4, %v498
        %v500 = vrot.slane %v468, %v499
        %502 = vbcast.lane.b32.xlu0 %v500, 256
        %v503 = vpop.permute.xlu0 %502
        %v504 = vlaneseq
        %v505 = vshrl.u32 %v504, 7
        %v506 = vsub.s32 5, %v505
        %v507 = vrot.slane %v468, %v506
        %509 = vbcast.lane.b32.xlu0 %v507, 256
        %v510 = vpop.permute.xlu0 %509
        %v511 = vlaneseq
        %v512 = vshrl.u32 %v511, 7
        %v513 = vsub.s32 6, %v512
        %v514 = vrot.slane %v468, %v513
        %516 = vbcast.lane.b32.xlu0 %v514, 256
        %v517 = vpop.permute.xlu0 %516
        %v518 = vlaneseq
        %v519 = vshrl.u32 %v518, 7
        %v520 = vsub.s32 7, %v519
        %v521 = vrot.slane %v468, %v520
        %523 = vbcast.lane.b32.xlu0 %v521, 256
        %v524 = vpop.permute.xlu0 %523
        %v525 = vmul.f32 %v475, %v336
        %v526 = vmul.f32 %v482, %v337
        %v527 = vmul.f32 %v489, %v338
        %v528 = vmul.f32 %v496, %v339
        %v529 = vmul.f32 %v503, %v340
        %v530 = vmul.f32 %v510, %v341
        %v531 = vmul.f32 %v517, %v342
        %v532 = vmul.f32 %v524, %v343
        %v533 = vsel %vm352, %v525, 0.0
        %v534 = vrot.slane %v533, 4
        %v535 = vadd.f32 %v533, %v534
        %v536 = vrot.slane %v535, 2
        %v537 = vadd.f32 %v535, %v536
        %v538 = vrot.slane %v537, 1
        %v539 = vadd.f32 %v537, %v538
        %v540 = vsel %vm352, %v526, 0.0
        %v541 = vrot.slane %v540, 4
        %v542 = vadd.f32 %v540, %v541
        %v543 = vrot.slane %v542, 2
        %v544 = vadd.f32 %v542, %v543
        %v545 = vrot.slane %v544, 1
        %v546 = vadd.f32 %v544, %v545
        %v547 = vsel %vm352, %v527, 0.0
        %v548 = vrot.slane %v547, 4
        %v549 = vadd.f32 %v547, %v548
        %v550 = vrot.slane %v549, 2
        %v551 = vadd.f32 %v549, %v550
        %v552 = vrot.slane %v551, 1
        %v553 = vadd.f32 %v551, %v552
        %v554 = vsel %vm352, %v528, 0.0
        %v555 = vrot.slane %v554, 4
        %v556 = vadd.f32 %v554, %v555
        %v557 = vrot.slane %v556, 2
        %v558 = vadd.f32 %v556, %v557
        %v559 = vrot.slane %v558, 1
        %v560 = vadd.f32 %v558, %v559
        %v561 = vsel %vm352, %v529, 0.0
        %v562 = vrot.slane %v561, 4
        %v563 = vadd.f32 %v561, %v562
        %v564 = vrot.slane %v563, 2
        %v565 = vadd.f32 %v563, %v564
        %v566 = vrot.slane %v565, 1
        %v567 = vadd.f32 %v565, %v566
        %v568 = vsel %vm352, %v530, 0.0
        %v569 = vrot.slane %v568, 4
        %v570 = vadd.f32 %v568, %v569
        %v571 = vrot.slane %v570, 2
        %v572 = vadd.f32 %v570, %v571
        %v573 = vrot.slane %v572, 1
        %v574 = vadd.f32 %v572, %v573
        %v575 = vsel %vm352, %v531, 0.0
        %v576 = vrot.slane %v575, 4
        %v577 = vadd.f32 %v575, %v576
        %v578 = vrot.slane %v577, 2
        %v579 = vadd.f32 %v577, %v578
        %v580 = vrot.slane %v579, 1
        %v581 = vadd.f32 %v579, %v580
        %v582 = vsel %vm352, %v532, 0.0
        %v583 = vrot.slane %v582, 4
        %v584 = vadd.f32 %v582, %v583
        %v585 = vrot.slane %v584, 2
        %v586 = vadd.f32 %v584, %v585
        %v587 = vrot.slane %v586, 1
        %v588 = vadd.f32 %v586, %v587
        %v589 = vld [vmem:[%s5] sm:$0xff]
        %v590 = vld [vmem:[%s5 + $0x8] sm:$0xff]
        %v591 = vld [vmem:[%s5 + $0x10] sm:$0xff]
        %v592 = vld [vmem:[%s5 + $0x18] sm:$0xff]
        %vm601 = vcmask 1041409
        %v602 = vsel %vm601, %v546, %v539
        %vm603 = vcmask 1042434
        %v604 = vsel %vm603, %v553, %v602
        %vm605 = vcmask 1043459
        %v606 = vsel %vm605, %v560, %v604
        %vm607 = vcmask 1044484
        %v608 = vsel %vm607, %v567, %v606
        %vm609 = vcmask 1045509
        %v610 = vsel %vm609, %v574, %v608
        %vm611 = vcmask 1046534
        %v612 = vsel %vm611, %v581, %v610
        %vm613 = vcmask 1047559
        %v614 = vsel %vm613, %v588, %v612
        %v615 = vsel %vm352, %v614, 0
        %617 = vmatprep.subr.mxu0 0.0
        %618 = vmatpush1.msra.mxu0 %v589
        %619 = vmatprep.subr.mxu0 0.0
        %620 = vmatpush1.msra.mxu0 %v590
        %621 = vmatprep.subr.mxu0 0.0
        %622 = vmatpush1.msra.mxu0 %v591
        %623 = vmatprep.subr.mxu0 0.0
        %624 = vmatpush1.msra.mxu0 %v592
        %625 = vmatprep.subr.mxu0 0.0
        %626 = vmatpush1.msra.mxu0 0.0
        %627 = vmatprep.subr.mxu0 0.0
        %628 = vmatpush1.msra.mxu0 0.0
        %629 = vmatprep.subr.mxu0 0.0
        %630 = vmatpush1.msra.mxu0 0.0
        %631 = vmatprep.subr.mxu0 0.0
        %632 = vmatpush1.msra.mxu0 0.0
        %633 = vmatprep.subr.mxu0 0.0
        %634 = vmatpush1.msra.mxu0 0.0
        %635 = vmatprep.subr.mxu0 0.0
        %636 = vmatpush1.msra.mxu0 0.0
        %637 = vmatprep.subr.mxu0 0.0
        %638 = vmatpush1.msra.mxu0 0.0
        %639 = vmatprep.subr.mxu0 0.0
        %640 = vmatpush1.msra.mxu0 0.0
        %641 = vmatprep.subr.mxu0 0.0
        %642 = vmatpush1.msra.mxu0 0.0
        %643 = vmatprep.subr.mxu0 0.0
        %644 = vmatpush1.msra.mxu0 0.0
        %645 = vmatprep.subr.mxu0 0.0
        %646 = vmatpush1.msra.mxu0 0.0
        %647 = vmatprep.subr.mxu0 0.0
        %648 = vmatpush1.msra.mxu0 0.0
        %649 = vmatprep.subr.mxu0 0.0
        %650 = vmatpush1.msra.mxu0 0.0
        %651 = vmatprep.subr.mxu0 0.0
        %652 = vmatpush1.msra.mxu0 0.0
        %653 = vmatprep.subr.mxu0 0.0
        %654 = vmatpush1.msra.mxu0 0.0
        %655 = vmatprep.subr.mxu0 0.0
        %656 = vmatpush1.msra.mxu0 0.0
        %657 = vmatprep.subr.mxu0 0.0
        %658 = vmatpush1.msra.mxu0 0.0
        %659 = vmatprep.subr.mxu0 0.0
        %660 = vmatpush1.msra.mxu0 0.0
        %661 = vmatprep.subr.mxu0 0.0
        %662 = vmatpush1.msra.mxu0 0.0
        %663 = vmatprep.subr.mxu0 0.0
        %664 = vmatpush1.msra.mxu0 0.0
        %665 = vmatprep.subr.mxu0 0.0
        %666 = vmatpush1.msra.mxu0 0.0
        %667 = vmatprep.subr.mxu0 0.0
        %668 = vmatpush1.msra.mxu0 0.0
        %669 = vmatprep.subr.mxu0 0.0
        %670 = vmatpush1.msra.mxu0 0.0
        %671 = vmatprep.subr.mxu0 0.0
        %672 = vmatpush1.msra.mxu0 0.0
        %673 = vmatprep.subr.mxu0 0.0
        %674 = vmatpush1.msra.mxu0 0.0
        %675 = vmatprep.subr.mxu0 0.0
        %676 = vmatpush1.msra.mxu0 0.0
        %677 = vmatprep.subr.mxu0 0.0
        %678 = vmatpush1.msra.mxu0 0.0
        %679 = vmatprep.subr.mxu0 0.0
        %680 = vmatpush1.msra.mxu0 0.0
        %681 = vmatprep.mubr.f32.mxu0 0.0
        %682 = vmatmul.mubr.f32.gmra.mrb[0].mxu0 %v615
        %v683 = vpop.f32.mrb[0].mxu0
        %v684 = vadd.f32 0.0, %v683
        %v685 = vpop.f32.mrb[0].mxu0
        %686 = vdwg.mxu0
        %688 = vrot.lane.b32.xlu0 %v684, 8
        %v689 = vpop.permute.xlu0 %688
        %v691 = vadd.f32 %v451, %v689
        %v692 = vmax.f32 %v691, 0.0
        %v693 = vld [vmem:[%s4] sm:$0xff]
        %v694 = vld [vmem:[%s4 + $0x8] sm:$0xff]
        %v695 = vld [vmem:[%s4 + $0x10] sm:$0xff]
        %v696 = vld [vmem:[%s4 + $0x18] sm:$0xff]
        %v698 = vlaneseq
        %v699 = vshrl.u32 %v698, 7
        %v700 = vsub.s32 0, %v699
        %v701 = vrot.slane %v345, %v700
        %704 = vrot.lane.b32.xlu0 %v692, 120
        %v705 = vpop.permute.xlu0 %704
        %v706 = vsel %vm352, %v705, 0
        %708 = vmatprep.subr.mxu0 0.0
        %709 = vmatpush1.msra.mxu0 %v693
        %710 = vmatprep.subr.mxu0 0.0
        %711 = vmatpush1.msra.mxu0 %v694
        %712 = vmatprep.subr.mxu0 0.0
        %713 = vmatpush1.msra.mxu0 %v695
        %714 = vmatprep.subr.mxu0 0.0
        %715 = vmatpush1.msra.mxu0 %v696
        %716 = vmatprep.subr.mxu0 0.0
        %717 = vmatpush1.msra.mxu0 0.0
        %718 = vmatprep.subr.mxu0 0.0
        %719 = vmatpush1.msra.mxu0 0.0
        %720 = vmatprep.subr.mxu0 0.0
        %721 = vmatpush1.msra.mxu0 0.0
        %722 = vmatprep.subr.mxu0 0.0
        %723 = vmatpush1.msra.mxu0 0.0
        %724 = vmatprep.subr.mxu0 0.0
        %725 = vmatpush1.msra.mxu0 0.0
        %726 = vmatprep.subr.mxu0 0.0
        %727 = vmatpush1.msra.mxu0 0.0
        %728 = vmatprep.subr.mxu0 0.0
        %729 = vmatpush1.msra.mxu0 0.0
        %730 = vmatprep.subr.mxu0 0.0
        %731 = vmatpush1.msra.mxu0 0.0
        %732 = vmatprep.subr.mxu0 0.0
        %733 = vmatpush1.msra.mxu0 0.0
        %734 = vmatprep.subr.mxu0 0.0
        %735 = vmatpush1.msra.mxu0 0.0
        %736 = vmatprep.subr.mxu0 0.0
        %737 = vmatpush1.msra.mxu0 0.0
        %738 = vmatprep.subr.mxu0 0.0
        %739 = vmatpush1.msra.mxu0 0.0
        %740 = vmatprep.subr.mxu0 0.0
        %741 = vmatpush1.msra.mxu0 0.0
        %742 = vmatprep.subr.mxu0 0.0
        %743 = vmatpush1.msra.mxu0 0.0
        %744 = vmatprep.subr.mxu0 0.0
        %745 = vmatpush1.msra.mxu0 0.0
        %746 = vmatprep.subr.mxu0 0.0
        %747 = vmatpush1.msra.mxu0 0.0
        %748 = vmatprep.subr.mxu0 0.0
        %749 = vmatpush1.msra.mxu0 0.0
        %750 = vmatprep.subr.mxu0 0.0
        %751 = vmatpush1.msra.mxu0 0.0
        %752 = vmatprep.subr.mxu0 0.0
        %753 = vmatpush1.msra.mxu0 0.0
        %754 = vmatprep.subr.mxu0 0.0
        %755 = vmatpush1.msra.mxu0 0.0
        %756 = vmatprep.subr.mxu0 0.0
        %757 = vmatpush1.msra.mxu0 0.0
        %758 = vmatprep.subr.mxu0 0.0
        %759 = vmatpush1.msra.mxu0 0.0
        %760 = vmatprep.subr.mxu0 0.0
        %761 = vmatpush1.msra.mxu0 0.0
        %762 = vmatprep.subr.mxu0 0.0
        %763 = vmatpush1.msra.mxu0 0.0
        %764 = vmatprep.subr.mxu0 0.0
        %765 = vmatpush1.msra.mxu0 0.0
        %766 = vmatprep.subr.mxu0 0.0
        %767 = vmatpush1.msra.mxu0 0.0
        %768 = vmatprep.subr.mxu0 0.0
        %769 = vmatpush1.msra.mxu0 0.0
        %770 = vmatprep.subr.mxu0 0.0
        %771 = vmatpush1.msra.mxu0 0.0
        %772 = vmatprep.mubr.f32.mxu0 0.0
        %773 = vmatmul.mubr.f32.gmra.mrb[0].mxu0 %v706
        %v774 = vpop.f32.mrb[0].mxu0
        %v775 = vadd.f32 %v701, %v774
        %v776 = vpop.f32.mrb[0].mxu0
        %777 = vdwg.mxu0
        %778 = vrot.lane.b32.xlu0 %v441, 80
        %v779 = vpop.permute.xlu0 %778
        %v781 = vadd.f32 %v775, %v779
        %v782 = vxor.u32 %v781, 2147483648
        %v783 = vmul.f32 %v782, 1.442695
        %v784 = vpow.pop %v783
        %v785 = vadd.f32 %v784, 1.0
        %v786 = vrcp.pop %v785
        %v787 = vmul.f32 1.0, %v786
        %v789 = vlaneseq
        %v790 = vshrl.u32 %v789, 7
        %v791 = vsub.s32 0, %v790
        %v792 = vrot.slane %v346, %v791
        %793 = vrot.lane.b32.xlu0 %v792, 112
        %v794 = vpop.permute.xlu0 %793
        %v796 = vadd.f32 %v441, %v794
        %v797 = vadd.f32 %v443, %v794
        %800 = vrot.lane.b32.xlu0 %v796, 16
        %v801 = vpop.permute.xlu0 %800
        %802 = vrot.lane.b32.xlu0 %v797, 16
        %v803 = vpop.permute.xlu0 %802
        %vm804 = vcmask 130048
        %v805 = vsel %vm804, %v801, %v803
        %v807 = vmul.f32 %v787, %v805
        %809 = vrot.lane.b32.xlu0 %v807, 64
        %v810 = vpop.permute.xlu0 %809
        %v812 = vadd.f32 %v775, %v810
        %v813 = vtanh.pop %v812
        %v814 = vsub.f32 1.0, %v787
        %816 = vrot.lane.b32.xlu0 %v813, 96
        %v817 = vpop.permute.xlu0 %816
        %v819 = vmul.f32 %v814, %v817
        %v820 = vmul.f32 %v787, %v350
        %v821 = vadd.f32 %v819, %v820
        %823 = vrot.lane.b32.xlu0 %v821, 96
        %v824 = vpop.permute.xlu0 %823
        %826 = vst.msk [vmem:[#allocation2] sm:$0xff] %vm352, %v824
        %v827 = vld [vmem:[%s6] sm:$0xff]
        %v828 = vld [vmem:[%s6 + $0x8] sm:$0xff]
        %v829 = vld [vmem:[%s6 + $0x10] sm:$0xff]
        %v830 = vld [vmem:[%s6 + $0x18] sm:$0xff]
        %v832 = vlaneseq
        %v833 = vshrl.u32 %v832, 7
        %v834 = vsub.s32 0, %v833
        %v835 = vrot.slane %v347, %v834
        %v837 = vsel %vm352, %v824, 0
        %839 = vmatprep.subr.mxu0 0.0
        %840 = vmatpush1.msra.mxu0 %v827
        %841 = vmatprep.subr.mxu0 0.0
        %842 = vmatpush1.msra.mxu0 %v828
        %843 = vmatprep.subr.mxu0 0.0
        %844 = vmatpush1.msra.mxu0 %v829
        %845 = vmatprep.subr.mxu0 0.0
        %846 = vmatpush1.msra.mxu0 %v830
        %847 = vmatprep.subr.mxu0 0.0
        %848 = vmatpush1.msra.mxu0 0.0
        %849 = vmatprep.subr.mxu0 0.0
        %850 = vmatpush1.msra.mxu0 0.0
        %851 = vmatprep.subr.mxu0 0.0
        %852 = vmatpush1.msra.mxu0 0.0
        %853 = vmatprep.subr.mxu0 0.0
        %854 = vmatpush1.msra.mxu0 0.0
        %855 = vmatprep.subr.mxu0 0.0
        %856 = vmatpush1.msra.mxu0 0.0
        %857 = vmatprep.subr.mxu0 0.0
        %858 = vmatpush1.msra.mxu0 0.0
        %859 = vmatprep.subr.mxu0 0.0
        %860 = vmatpush1.msra.mxu0 0.0
        %861 = vmatprep.subr.mxu0 0.0
        %862 = vmatpush1.msra.mxu0 0.0
        %863 = vmatprep.subr.mxu0 0.0
        %864 = vmatpush1.msra.mxu0 0.0
        %865 = vmatprep.subr.mxu0 0.0
        %866 = vmatpush1.msra.mxu0 0.0
        %867 = vmatprep.subr.mxu0 0.0
        %868 = vmatpush1.msra.mxu0 0.0
        %869 = vmatprep.subr.mxu0 0.0
        %870 = vmatpush1.msra.mxu0 0.0
        %871 = vmatprep.subr.mxu0 0.0
        %872 = vmatpush1.msra.mxu0 0.0
        %873 = vmatprep.subr.mxu0 0.0
        %874 = vmatpush1.msra.mxu0 0.0
        %875 = vmatprep.subr.mxu0 0.0
        %876 = vmatpush1.msra.mxu0 0.0
        %877 = vmatprep.subr.mxu0 0.0
        %878 = vmatpush1.msra.mxu0 0.0
        %879 = vmatprep.subr.mxu0 0.0
        %880 = vmatpush1.msra.mxu0 0.0
        %881 = vmatprep.subr.mxu0 0.0
        %882 = vmatpush1.msra.mxu0 0.0
        %883 = vmatprep.subr.mxu0 0.0
        %884 = vmatpush1.msra.mxu0 0.0
        %885 = vmatprep.subr.mxu0 0.0
        %886 = vmatpush1.msra.mxu0 0.0
        %887 = vmatprep.subr.mxu0 0.0
        %888 = vmatpush1.msra.mxu0 0.0
        %889 = vmatprep.subr.mxu0 0.0
        %890 = vmatpush1.msra.mxu0 0.0
        %891 = vmatprep.subr.mxu0 0.0
        %892 = vmatpush1.msra.mxu0 0.0
        %893 = vmatprep.subr.mxu0 0.0
        %894 = vmatpush1.msra.mxu0 0.0
        %895 = vmatprep.subr.mxu0 0.0
        %896 = vmatpush1.msra.mxu0 0.0
        %897 = vmatprep.subr.mxu0 0.0
        %898 = vmatpush1.msra.mxu0 0.0
        %899 = vmatprep.subr.mxu0 0.0
        %900 = vmatpush1.msra.mxu0 0.0
        %901 = vmatprep.subr.mxu0 0.0
        %902 = vmatpush1.msra.mxu0 0.0
        %903 = vmatprep.mubr.f32.mxu0 0.0
        %904 = vmatmul.mubr.f32.gmra.mrb[0].mxu0 %v837
        %v905 = vpop.f32.mrb[0].mxu0
        %v906 = vadd.f32 %v835, %v905
        %v907 = vpop.f32.mrb[0].mxu0
        %908 = vdwg.mxu0
        %v909 = vsel %vm804, %v906, -inf
        %910 = vmax.xlane.f32.xlu0 %v909
        %v911 = vpop.xlane.xlu0 %910
        %v912 = vsub.f32 %v906, %v911
        %v913 = vmul.f32 %v912, 1.442695
        %v914 = vpow.pop %v913
        %v915 = vsel %vm804, %v914, 0.0
        %916 = vadd.xlane.f32.xlu0 %v915
        %v917 = vpop.xlane.xlu0 %916
        %v918 = vlog2.pop %v917
        %v919 = vmul.f32 %v918, 0.6931472
        %v920 = vsub.f32 %v912, %v919
        %922 = vrot.lane.b32.xlu0 %v468, 16
        %v923 = vpop.permute.xlu0 %922
        %v925 = vsel %vm804, %v920, %v923
        %vm926 = vcmask 195584
        %v927 = vsel %vm926, %v925, 0.0
        %928 = vst [vmem:[%s326] sm:$0xff] %v927
        %p929 = scmp.eq.s32.totalorder %s22, 4
        // Predicated region
        $region57: #{attn_decoder_decode.1} parent=51 // pred_check
          %p930 = pneg %p929
        $region58: #{attn_decoder_decode.1} parent=51 // pred_check_branch
          %932 = sbr.rel (%p930) target = $region60
        $region59: #{attn_decoder_decode.1} parent=51 // pred_region
          %933 = vst.msk [vmem:[#allocation3] sm:$0xff] %vm352, %v824
        $region60: #{attn_decoder_decode.1} parent=51 // pred_fallthru
          _
        %p934 = scmp.lt.s32.totalorder %s22, 4
        %s935 = scalar_select %p934, %s22, 4
        %s936 = smul.addr %s935, 8
        %s937 = scalar_lea.vmem %s8, %s936
        // Predicated region
        $region61: #{attn_decoder_decode.1} parent=51 // pred_check
          %p938 = pneg %p213
        $region62: #{attn_decoder_decode.1} parent=51 // pred_check_branch
          %940 = sbr.rel (%p938) target = $region64
        $region63: #{attn_decoder_decode.1} parent=51 // pred_region
          _
        $region64: #{attn_decoder_decode.1} parent=51 // pred_fallthru
          _
        // Predicated region
        $region65: #{attn_decoder_decode.1} parent=51 // pred_check
          %p941 = pneg %p234
        $region66: #{attn_decoder_decode.1} parent=51 // pred_check_branch
          %943 = sbr.rel (%p941) target = $region68
        $region67: #{attn_decoder_decode.1} parent=51 // pred_region
          %s945 = ssub.s32 128, 128
          %946 = vsyncadd [#allocation4], %s945
          %s948 = sshll.u32 [#allocation3], 4
          %s949 = int_to_ptr.vmem [resolvable:$true] %s948
          %951 = dma.vmem_to_hbm [thread:$0]  %s949, 128, %s9, [#allocation4]
        $region68: #{attn_decoder_decode.1} parent=51 // pred_fallthru
          _
        // Predicated region
        $region69: #{attn_decoder_decode.1} parent=51 // pred_check
          %p952 = pneg %p234
        $region70: #{attn_decoder_decode.1} parent=51 // pred_check_branch
          %954 = sbr.rel (%p952) target = $region72
        $region71: #{attn_decoder_decode.1} parent=51 // pred_region
          %955 = dma.done [#allocation4], 128
        $region72: #{attn_decoder_decode.1} parent=51 // pred_fallthru
          _
      $region52: #{attn_decoder_decode.1} parent=5 // pred_fallthru
        _
      %p956 = scmp.le.s32.totalorder 2, %s17
      // Predicated region
      $region73: #{attn_decoder_decode.1} parent=5 // pred_check
        %p957 = pneg %p956
      $region74: #{attn_decoder_decode.1} parent=5 // pred_check_branch
        %959 = sbr.rel (%p957) target = $region76
      $region75: #{attn_decoder_decode.1} parent=5 // pred_region
        %s960 = ssub.s32 %s17, 2
        // Predicated region
        $region77: #{attn_decoder_decode.1} parent=75 // pred_check
          %p961 = pneg %p219
        $region78: #{attn_decoder_decode.1} parent=75 // pred_check_branch
          %963 = sbr.rel (%p961) target = $region80
        $region79: #{attn_decoder_decode.1} parent=75 // pred_region
          %p964 = scmp.lt.s32.totalorder %s23, 4
          %s965 = scalar_select %p964, %s23, 4
          %s966 = smul.addr %s965, 8
          %s967 = scalar_lea.vmem %s8, %s966
        $region80: #{attn_decoder_decode.1} parent=75 // pred_fallthru
          _
      $region76: #{attn_decoder_decode.1} parent=5 // pred_fallthru
        _
    $region6: #{attn_decoder_decode.1} parent=1 // loop_footer
      %s21 = sadd.s32 1, %s17
    $region7: #{attn_decoder_decode.1} parent=1 // loop_footer_branch
      %16 = sbr.rel target = $region3
    $region8: #{attn_decoder_decode.1} parent=1 // loop_exit
      _
    %968 = vsyncpa [#allocation4], 1
    %s969 = scalar_lea.sflag [#allocation4], 1
    %970 = vsyncpa %s969, 1

</llo_original>
